<compile_context>
chip_gen: v7x
topology: tpu7x:2x2x1
jax: 0.10.0
libtpu: 0.0.40
codegen_flags: <defaults>
</compile_context>

<pallas_src>
from functools import partial

import jax
import jax.numpy as jnp
from jax.experimental import pallas as pl
from jax.experimental.pallas import tpu as pltpu


# ---------------------------------------------------------------------------
# Kernels
# ---------------------------------------------------------------------------
def _roll1_concat(x):
    # rolled[i] = x[(i - 1) % B]  == torch.roll(x, 1, 0) == jnp.roll(x, 1, 0)
    return jnp.concatenate([x[-1:, :], x[:-1, :]], axis=0)


def _mixup_image_kernel(lam_ref, x_ref, xo_ref, *, use_xlu_roll):
    """One (B, TILE) lane tile of:  out = lam * x + (1 - lam) * roll(x, 1, 0)."""
    lam = lam_ref[0]                           # f32 scalar from SMEM
    x = x_ref[...].astype(jnp.float32)         # mix in f32 (v5e has no bf16 VALU)
    # TODO(synk): on v6e/v7x (bf16 VALU) the mix could stay packed in bf16
    # (gating the XLU roll on B % 16 == 0); kept f32 so one kernel fits all gens.
    if use_xlu_roll:
        # torch.roll(x, 1, 0) as a single XLU sublane rotation (no VMEM copy).
        x_rolled = pltpu.roll(x, shift=1, axis=0)
    else:
        x_rolled = _roll1_concat(x)
    xo_ref[...] = (lam * x + (1.0 - lam) * x_rolled).astype(xo_ref.dtype)


def _mixup_target_kernel(lam_ref, t_ref, to_ref):
    """One-hot encode targets, then mix with the batch-rolled one-hot."""
    lam = lam_ref[0]
    B, NC = to_ref.shape
    classes = jax.lax.broadcasted_iota(jnp.int32, (B, NC), 1)
    onehot = (t_ref[...] == classes).astype(jnp.float32)        # (B, NC)
    onehot_rolled = _roll1_concat(onehot)
    to_ref[...] = (lam * onehot + (1.0 - lam) * onehot_rolled).astype(to_ref.dtype)


# ---------------------------------------------------------------------------
# Tile sizing (byte-based, generation-aware)
# ---------------------------------------------------------------------------
_TARGET_BLOCK_BYTES = 4 * 1024 * 1024     # ~HBM-roofline sweet spot per block
_VMEM_LIMIT_BYTES = 32 * 1024 * 1024      # raise v5e's 16 MiB scoped default


def _vmem_pipeline_budget_bytes():
    """Bytes the whole image pipeline (2 bufs x (in + out)) may occupy."""
    try:
        phys = pltpu.get_tpu_info().vmem_capacity_bytes
    except Exception:                      # non-TPU tracing / older jax
        phys = 64 * 1024 * 1024            # assume the smallest (v7x)
    # Quarter of physical VMEM, never above 24 MiB: 16 MiB pipeline on v7x
    # (64 MiB physical, shared by 2 TCs), 16 MiB (4 MiB blocks) on v5e/v6e.
    return min(phys // 4, 24 * 1024 * 1024)


def _pick_lane_tile(batch_size, chw, itemsize):
    budget = _vmem_pipeline_budget_bytes()
    block_bytes = min(_TARGET_BLOCK_BYTES, max(budget // 4, 512 * 1024))
    tile = block_bytes // (batch_size * itemsize)
    tile = max(128, (tile // 128) * 128)   # lane-aligned, byte-sized blocks
    if tile >= chw:
        return chw     # whole feature extent fits in one block (always legal)
    return tile        # ragged last block (chw % tile != 0) is masked by Pallas


# ---------------------------------------------------------------------------
# Wrapper
# ---------------------------------------------------------------------------
@partial(jax.jit,
         static_argnames=("num_classes", "p", "alpha", "lane_tile"),
         donate_argnums=(0,))
def random_mixup(batch, target, key, *, num_classes, p=0.5, alpha=1.0,
                 lane_tile=None):
    """JAX/Pallas equivalent of RandomMixup.forward.

    batch : (B, C, H, W) float
    target: (B,) int     (torch requires int64; any int dtype accepted here)
    Returns (mixed_batch (B, C, H, W), mixed_target (B, num_classes)).

    NOTE: `batch` is DONATED (in-place semantics, lets the aliased image mix
    avoid a copy) — callers must not read it after this call.
    `lane_tile` is a testing override for the image lane tile.
    """
    B, C, H, W = batch.shape
    chw = C * H * W
    itemsize = jnp.dtype(batch.dtype).itemsize

    # --- randomness (host/JAX glue, mirrors the torch module) ---------------
    # TODO(synk): torch's global RNG stream is not reproducible bit-for-bit;
    # the Bernoulli(p) gate and Beta(alpha, alpha) draw use jax.random instead.
    k_gate, k_beta = jax.random.split(key)
    apply_mix = jax.random.uniform(k_gate) < p              # torch.rand(1) < p
    lam = jax.random.beta(k_beta, alpha, alpha)             # Dirichlet([a,a])[0]
    lam_eff = jnp.where(apply_mix, lam, 1.0).astype(jnp.float32).reshape((1,))

    x2d = batch.reshape(B, chw)
    t2d = target.astype(jnp.int32).reshape(B, 1)

    # --- image mixup: 1-D grid over the flattened feature (lane) axis -------
    tile = _pick_lane_tile(B, chw, itemsize) if lane_tile is None else lane_tile
    grid = (pl.cdiv(chw, tile),)
    out_x = pl.pallas_call(
        partial(_mixup_image_kernel, use_xlu_roll=(B % 8 == 0)),
        out_shape=jax.ShapeDtypeStruct((B, chw), batch.dtype),
        grid=grid,
        in_specs=[
            pl.BlockSpec(memory_space=pltpu.MemorySpace.SMEM),   # lam (whole)
            pl.BlockSpec((B, tile), lambda j: (0, j)),           # image tile
        ],
        out_specs=pl.BlockSpec((B, tile), lambda j: (0, j)),
        input_output_aliases={1: 0},             # in-place per lane tile
        compiler_params=pltpu.CompilerParams(
            # "parallel": lets v7x shard disjoint lane tiles across its 2 TCs;
            # near-zero (but harmless) effect on single-TC v5e/v6e.
            # TODO(synk): try pltpu.CORE_PARALLEL on v7x once verified safe on
            # single-TC generations.
            dimension_semantics=("parallel",),
            vmem_limit_bytes=_VMEM_LIMIT_BYTES,
        ),
        cost_estimate=pl.CostEstimate(
            flops=3 * B * chw,
            transcendentals=0,
            bytes_accessed=2 * B * chw * itemsize,
        ),
    )(lam_eff, x2d)

    # --- one-hot + target mixup: tiny, runs exactly once ---------------------
    # TODO(synk): folding this into grid step 0 of the image kernel would drop
    # one launch but puts a constant-index output block on the "parallel" lane
    # axis (unsafe under v7x dual-TC sharding), so it stays a separate call.
    out_t = pl.pallas_call(
        _mixup_target_kernel,
        out_shape=jax.ShapeDtypeStruct((B, num_classes), batch.dtype),
        in_specs=[
            pl.BlockSpec(memory_space=pltpu.MemorySpace.SMEM),   # lam scalar
            pl.BlockSpec(memory_space=pltpu.MemorySpace.VMEM),   # targets (B,1)
        ],
        out_specs=pl.BlockSpec(memory_space=pltpu.MemorySpace.VMEM),
    )(lam_eff, t2d)

    return out_x.reshape(B, C, H, W), out_t


# ---------------------------------------------------------------------------
# Self-test
# ---------------------------------------------------------------------------
def _reference_mixup(batch, target, key, *, num_classes, p, alpha):
    """Pure-JAX reference using the identical lam_eff draw as random_mixup."""
    k_gate, k_beta = jax.random.split(key)
    apply_mix = jax.random.uniform(k_gate) < p
    lam = jax.random.beta(k_beta, alpha, alpha)
    lam_eff = jnp.where(apply_mix, lam, 1.0).astype(jnp.float32)
    onehot = jax.nn.one_hot(target, num_classes, dtype=batch.dtype)
    mixed_b = lam_eff * batch + (1.0 - lam_eff) * jnp.roll(batch, 1, axis=0)
    mixed_t = lam_eff * onehot + (1.0 - lam_eff) * jnp.roll(onehot, 1, axis=0)
    return mixed_b, mixed_t


if __name__ == "__main__":
    NUM_CLASSES = 10
    key = jax.random.PRNGKey(0)

    # (B, C, H, W, lane_tile):
    #  * (16, 4, 16, 16, None): sublane-aligned B -> XLU sublane roll crossing
    #    two sublane groups; auto byte-sized tile (single lane block here).
    #  * (12, 3, 15, 15, 256): B not a multiple of 8 -> concat roll; chw = 675
    #    is not a multiple of the 256-lane tile -> ragged, masked last block.
    configs = [
        (16, 4, 16, 16, None),
        (12, 3, 15, 15, 256),
    ]
    ok = True
    for (B, C, H, W, lane_tile) in configs:
        key, k_img, k_tgt, k_mix = jax.random.split(key, 4)
        batch = jax.random.normal(k_img, (B, C, H, W), dtype=jnp.float32)
        target = jax.random.randint(k_tgt, (B,), 0, NUM_CLASSES, dtype=jnp.int32)

        # Reference BEFORE the kernel call: `batch` is donated to random_mixup
        # (in-place semantics), so it must not be read afterwards.
        ref_b, ref_t = jax.block_until_ready(
            _reference_mixup(batch, target, k_mix,
                             num_classes=NUM_CLASSES, p=0.5, alpha=1.0))

        out_b, out_t = random_mixup(batch, target, k_mix,
                                    num_classes=NUM_CLASSES, p=0.5, alpha=1.0,
                                    lane_tile=lane_tile)
        out_b, out_t = jax.block_until_ready((out_b, out_t))

        assert out_b.shape == (B, C, H, W) and out_b.dtype == jnp.float32
        assert out_t.shape == (B, NUM_CLASSES) and out_t.dtype == jnp.float32
        ok &= bool(jnp.allclose(out_b, ref_b, atol=1e-5, rtol=1e-5))
        ok &= bool(jnp.allclose(out_t, ref_t, atol=1e-5, rtol=1e-5))

    assert ok
    print("KERNEL_OK")
</pallas_src>

<mosaic_0001>
module attributes {stable_mosaic.version = 11 : i64} {
  func.func @_mixup_image_kernel(%arg0: i32, %arg1: memref<1xf32, #tpu.memory_space<smem>>, %arg2: memref<16x1024xf32, #tpu.memory_space<vmem>>, %arg3: memref<16x1024xf32, #tpu.memory_space<vmem>>) attributes {dimension_semantics = [#tpu.dimension_semantics<parallel>], iteration_bounds = array<i64: 1>, scalar_prefetch = 0 : i64, scratch_operands = 0 : i64, tpu.core_type = #tpu.core_type<tc>, window_params = [{transform_indices = @transform_0, window_bounds = array<i64: 1>}, {transform_indices = @transform_1, window_bounds = array<i64: 16, 1024>}, {transform_indices = @transform_2, window_bounds = array<i64: 16, 1024>}]} {
    %c0 = arith.constant 0 : index
    %0 = memref.load %arg1[%c0] : memref<1xf32, #tpu.memory_space<smem>>
    %c0_0 = arith.constant 0 : index
    %c0_1 = arith.constant 0 : index
    %1 = vector.load %arg2[%c0_0, %c0_1] : memref<16x1024xf32, #tpu.memory_space<vmem>>, vector<16x1024xf32>
    %c1_i32 = arith.constant 1 : i32
    %2 = tpu.dynamic_rotate %1 by %c1_i32 dim 0 : vector<16x1024xf32>, i32 -> vector<16x1024xf32>
    %3 = vector.broadcast %0 : f32 to vector<16x1024xf32>
    %4 = arith.mulf %3, %1 : vector<16x1024xf32>
    %cst = arith.constant 1.000000e+00 : f32
    %5 = arith.subf %cst, %0 : f32
    %6 = vector.broadcast %5 : f32 to vector<16x1024xf32>
    %7 = arith.mulf %6, %2 : vector<16x1024xf32>
    %8 = arith.addf %4, %7 : vector<16x1024xf32>
    %c0_2 = arith.constant 0 : index
    %c0_3 = arith.constant 0 : index
    %9 = vector.load %arg3[%c0_2, %c0_3] : memref<16x1024xf32, #tpu.memory_space<vmem>>, vector<16x1024xf32>
    tpu.vector_store %arg3[%c0_2, %c0_3], %8 {strides = array<i32>} : memref<16x1024xf32, #tpu.memory_space<vmem>>, vector<16x1024xf32>,
    return
  }
  func.func @transform_0(%arg0: i32) -> i32 {
    %c0_i32 = arith.constant 0 : i32
    %c0_i32_0 = arith.constant 0 : i32
    return %c0_i32 : i32
  }
  func.func @transform_1(%arg0: i32) -> (i32, i32) {
    %c0_i32 = arith.constant 0 : i32
    %c0_i32_0 = arith.constant 0 : i32
    return %c0_i32, %arg0 : i32, i32
  }
  func.func @transform_2(%arg0: i32) -> (i32, i32) {
    %c0_i32 = arith.constant 0 : i32
    %c0_i32_0 = arith.constant 0 : i32
    return %c0_i32, %arg0 : i32, i32
  }
}

module attributes {stable_mosaic.version = 11 : i64} {
  func.func @_mixup_target_kernel(%arg0: memref<1xf32, #tpu.memory_space<smem>>, %arg1: memref<16x1xi32, #tpu.memory_space<vmem>>, %arg2: memref<16x10xf32, #tpu.memory_space<vmem>>) attributes {dimension_semantics = [], scalar_prefetch = 0 : i64, scratch_operands = 0 : i64, tpu.core_type = #tpu.core_type<tc>} {
    %c0 = arith.constant 0 : index
    %0 = memref.load %arg0[%c0] : memref<1xf32, #tpu.memory_space<smem>>
    %1 = tpu.iota {dimensions = array<i32: 1>} : vector<16x10xi32>
    %c0_0 = arith.constant 0 : index
    %c0_1 = arith.constant 0 : index
    %2 = vector.load %arg1[%c0_0, %c0_1] : memref<16x1xi32, #tpu.memory_space<vmem>>, vector<16x1xi32>
    %3 = vector.broadcast %2 : vector<16x1xi32> to vector<16x10xi32>
    %4 = arith.cmpi eq, %3, %1 : vector<16x10xi32>
    %5 = arith.extui %4 : vector<16x10xi1> to vector<16x10xi32>
    %6 = arith.sitofp %5 : vector<16x10xi32> to vector<16x10xf32>
    %7 = vector.extract_strided_slice %6 {offsets = [15, 0], sizes = [1, 10], strides = [1, 1]} : vector<16x10xf32> to vector<1x10xf32>
    %8 = vector.extract_strided_slice %6 {offsets = [0, 0], sizes = [15, 10], strides = [1, 1]} : vector<16x10xf32> to vector<15x10xf32>
    %9 = tpu.concatenate %7, %8 in 0 : vector<1x10xf32>, vector<15x10xf32> -> vector<16x10xf32>
    %10 = vector.broadcast %0 : f32 to vector<16x10xf32>
    %11 = arith.mulf %10, %6 : vector<16x10xf32>
    %cst = arith.constant 1.000000e+00 : f32
    %12 = arith.subf %cst, %0 : f32
    %13 = vector.broadcast %12 : f32 to vector<16x10xf32>
    %14 = arith.mulf %13, %9 : vector<16x10xf32>
    %15 = arith.addf %11, %14 : vector<16x10xf32>
    %c0_2 = arith.constant 0 : index
    %c0_3 = arith.constant 0 : index
    %16 = vector.load %arg2[%c0_2, %c0_3] : memref<16x10xf32, #tpu.memory_space<vmem>>, vector<16x10xf32>
    tpu.vector_store %arg2[%c0_2, %c0_3], %15 {strides = array<i32>} : memref<16x10xf32, #tpu.memory_space<vmem>>, vector<16x10xf32>,
    return
  }
}

</mosaic_0001>

<llo_original>
// kernel: random_mixup.2
$region0: #{random_mixup.2}
  #allocation0 [shape = 'u32[]', space=smem, size = 0x4, offset = 0x4, fixed_abs, tag = 'smem constant byte address 0x4 - core index']
  #allocation1 [shape = 'u32[144,128]{1,0:T(1,128)}', space=vmem, size = 0x12000, scoped, tag = 'internal scratch']
  #allocation2 [shape = 'f32[1]{0:T(128)S(6)}', space=smem, size = 0x200, scoped, tag = 'scoped memory for random_mixup.2']
  %s0 = inlined_call_operand.<no memory space> [shape: f32[1], index: 0, kind: input, shape index: {}]
  %s1 = inlined_call_operand.vmem [shape: f32[16,1024], index: 1, kind: input, shape index: {}, may-alias: {1,2}]
  %s2 = inlined_call_operand.vmem [shape: f32[16,1024], index: 2, kind: output, shape index: {}, may-alias: {1,2}]
  %s3 = sld [smem:[#allocation0]]
  $region18: #{random_mixup.2} parent=0
    _
  %s5 = ssub.s32 1, %s3
  %s6 = scalar_select 0, %s5, %s3
  %7 = sst [smem:[#allocation2]] %s0
  // Predicated region
  $region2: #{random_mixup.2} parent=0 // pred_check
    _
  $region3: #{random_mixup.2} parent=0 // pred_check_branch
    %9 = sbr.rel (0) target = $region5
  $region4: #{random_mixup.2} parent=0 // pred_region
    _
  $region5: #{random_mixup.2} parent=0 // pred_fallthru
    _
  // Predicated region
  $region6: #{random_mixup.2} parent=0 // pred_check
    _
  $region7: #{random_mixup.2} parent=0 // pred_check_branch
    %11 = sbr.rel (0) target = $region9
  $region8: #{random_mixup.2} parent=0 // pred_region
    _
  $region9: #{random_mixup.2} parent=0 // pred_fallthru
    _
  %s12 = sld [smem:[#allocation2]]
  %v13 = vld [vmem:[%s1] sm:$0xff]
  %v14 = vld [vmem:[%s1 + $0x8] sm:$0xff]
  %v15 = vld [vmem:[%s1 + $0x10] sm:$0xff]
  %v16 = vld [vmem:[%s1 + $0x18] sm:$0xff]
  %v17 = vld [vmem:[%s1 + $0x20] sm:$0xff]
  %v18 = vld [vmem:[%s1 + $0x28] sm:$0xff]
  %v19 = vld [vmem:[%s1 + $0x30] sm:$0xff]
  %v20 = vld [vmem:[%s1 + $0x38] sm:$0xff]
  %v21 = vld [vmem:[%s1 + $0x40] sm:$0xff]
  %v22 = vld [vmem:[%s1 + $0x48] sm:$0xff]
  %v23 = vld [vmem:[%s1 + $0x50] sm:$0xff]
  %v24 = vld [vmem:[%s1 + $0x58] sm:$0xff]
  %v25 = vld [vmem:[%s1 + $0x60] sm:$0xff]
  %v26 = vld [vmem:[%s1 + $0x68] sm:$0xff]
  %v27 = vld [vmem:[%s1 + $0x70] sm:$0xff]
  %v28 = vld [vmem:[%s1 + $0x78] sm:$0xff]
  %v29 = vrot.slane %v13, 7
  %v30 = vrot.slane %v14, 7
  %v31 = vrot.slane %v15, 7
  %v32 = vrot.slane %v16, 7
  %v33 = vrot.slane %v17, 7
  %v34 = vrot.slane %v18, 7
  %v35 = vrot.slane %v19, 7
  %v36 = vrot.slane %v20, 7
  %v37 = vrot.slane %v21, 7
  %v38 = vrot.slane %v22, 7
  %v39 = vrot.slane %v23, 7
  %v40 = vrot.slane %v24, 7
  %v41 = vrot.slane %v25, 7
  %v42 = vrot.slane %v26, 7
  %v43 = vrot.slane %v27, 7
  %v44 = vrot.slane %v28, 7
  %v45 = vlaneseq
  %v46 = vshrl.u32 %v45, 7
  %vm47 = vcmp.lt.s32.totalorder %v46, 1
  %v48 = vsel %vm47, %v29, %v37
  %v49 = vsel %vm47, %v30, %v38
  %v50 = vsel %vm47, %v31, %v39
  %v51 = vsel %vm47, %v32, %v40
  %v52 = vsel %vm47, %v33, %v41
  %v53 = vsel %vm47, %v34, %v42
  %v54 = vsel %vm47, %v35, %v43
  %v55 = vsel %vm47, %v36, %v44
  %v56 = vsel %vm47, %v37, %v29
  %v57 = vsel %vm47, %v38, %v30
  %v58 = vsel %vm47, %v39, %v31
  %v59 = vsel %vm47, %v40, %v32
  %v60 = vsel %vm47, %v41, %v33
  %v61 = vsel %vm47, %v42, %v34
  %v62 = vsel %vm47, %v43, %v35
  %v63 = vsel %vm47, %v44, %v36
  %v64 = vstv %s12
  %v65 = vmul.f32 %v64, %v13
  %v66 = vmul.f32 %v64, %v14
  %v67 = vmul.f32 %v64, %v15
  %v68 = vmul.f32 %v64, %v16
  %v69 = vmul.f32 %v64, %v17
  %v70 = vmul.f32 %v64, %v18
  %v71 = vmul.f32 %v64, %v19
  %v72 = vmul.f32 %v64, %v20
  %v73 = vmul.f32 %v64, %v21
  %v74 = vmul.f32 %v64, %v22
  %v75 = vmul.f32 %v64, %v23
  %v76 = vmul.f32 %v64, %v24
  %v77 = vmul.f32 %v64, %v25
  %v78 = vmul.f32 %v64, %v26
  %v79 = vmul.f32 %v64, %v27
  %v80 = vmul.f32 %v64, %v28
  %s81 = ssub.f32 1.0, %s12
  %v82 = vstv %s81
  %v83 = vmul.f32 %v82, %v56
  %v84 = vmul.f32 %v82, %v57
  %v85 = vmul.f32 %v82, %v58
  %v86 = vmul.f32 %v82, %v59
  %v87 = vmul.f32 %v82, %v60
  %v88 = vmul.f32 %v82, %v61
  %v89 = vmul.f32 %v82, %v62
  %v90 = vmul.f32 %v82, %v63
  %v91 = vmul.f32 %v82, %v48
  %v92 = vmul.f32 %v82, %v49
  %v93 = vmul.f32 %v82, %v50
  %v94 = vmul.f32 %v82, %v51
  %v95 = vmul.f32 %v82, %v52
  %v96 = vmul.f32 %v82, %v53
  %v97 = vmul.f32 %v82, %v54
  %v98 = vmul.f32 %v82, %v55
  %v99 = vadd.f32 %v65, %v83
  %v100 = vadd.f32 %v66, %v84
  %v101 = vadd.f32 %v67, %v85
  %v102 = vadd.f32 %v68, %v86
  %v103 = vadd.f32 %v69, %v87
  %v104 = vadd.f32 %v70, %v88
  %v105 = vadd.f32 %v71, %v89
  %v106 = vadd.f32 %v72, %v90
  %v107 = vadd.f32 %v73, %v91
  %v108 = vadd.f32 %v74, %v92
  %v109 = vadd.f32 %v75, %v93
  %v110 = vadd.f32 %v76, %v94
  %v111 = vadd.f32 %v77, %v95
  %v112 = vadd.f32 %v78, %v96
  %v113 = vadd.f32 %v79, %v97
  %v114 = vadd.f32 %v80, %v98
  %115 = vst [vmem:[%s2] sm:$0xff] %v99
  %116 = vst [vmem:[%s2 + $0x8] sm:$0xff] %v100
  %117 = vst [vmem:[%s2 + $0x10] sm:$0xff] %v101
  %118 = vst [vmem:[%s2 + $0x18] sm:$0xff] %v102
  %119 = vst [vmem:[%s2 + $0x20] sm:$0xff] %v103
  %120 = vst [vmem:[%s2 + $0x28] sm:$0xff] %v104
  %121 = vst [vmem:[%s2 + $0x30] sm:$0xff] %v105
  %122 = vst [vmem:[%s2 + $0x38] sm:$0xff] %v106
  %123 = vst [vmem:[%s2 + $0x40] sm:$0xff] %v107
  %124 = vst [vmem:[%s2 + $0x48] sm:$0xff] %v108
  %125 = vst [vmem:[%s2 + $0x50] sm:$0xff] %v109
  %126 = vst [vmem:[%s2 + $0x58] sm:$0xff] %v110
  %127 = vst [vmem:[%s2 + $0x60] sm:$0xff] %v111
  %128 = vst [vmem:[%s2 + $0x68] sm:$0xff] %v112
  %129 = vst [vmem:[%s2 + $0x70] sm:$0xff] %v113
  %130 = vst [vmem:[%s2 + $0x78] sm:$0xff] %v114
  // Predicated region
  $region10: #{random_mixup.2} parent=0 // pred_check
    _
  $region11: #{random_mixup.2} parent=0 // pred_check_branch
    %132 = sbr.rel (0) target = $region13
  $region12: #{random_mixup.2} parent=0 // pred_region
    _
  $region13: #{random_mixup.2} parent=0 // pred_fallthru
    _
  // Predicated region
  $region14: #{random_mixup.2} parent=0 // pred_check
    _
  $region15: #{random_mixup.2} parent=0 // pred_check_branch
    %134 = sbr.rel (0) target = $region17
  $region16: #{random_mixup.2} parent=0 // pred_region
    _
  $region17: #{random_mixup.2} parent=0 // pred_fallthru
    _

// kernel: random_mixup.3
$region0: #{random_mixup.3}
  #allocation0 [shape = 'u32[]', space=smem, size = 0x4, offset = 0x4, fixed_abs, tag = 'smem constant byte address 0x4 - core index']
  #allocation1 [shape = 'u32[144,128]{1,0:T(1,128)}', space=vmem, size = 0x12000, scoped, tag = 'internal scratch']
  #allocation2 [shape = 'f32[1]{0:T(128)S(6)}', space=smem, size = 0x200, scoped, tag = 'scoped memory for random_mixup.3']
  %s0 = inlined_call_operand.<no memory space> [shape: f32[1], index: 0, kind: input, shape index: {}]
  %s1 = inlined_call_operand.vmem [shape: s32[16,1], index: 1, kind: input, shape index: {}]
  %s2 = inlined_call_operand.hbm [shape: f32[16,10], index: 2, kind: output, shape index: {}]
  %s3 = sld [smem:[#allocation0]]
  $region18: #{random_mixup.3} parent=0
    _
  %s5 = ssub.s32 1, %s3
  %s6 = scalar_select 0, %s5, %s3
  %7 = sst [smem:[#allocation2]] %s0
  $region1: #{random_mixup.3} parent=0
    #allocation3 [shape = 'u8[8192]{0}', space=vmem, size = 0x2000, scoped, tag = 'output window, operand 0, single buffered']
    #allocation4 [shape = 's32[1]{0}', space=sflag, size = 0x4, scoped, tag = 'scoped memory for random_mixup.3']
    %8 = vsyncpa [#allocation4], 0
    // Predicated region
    $region2: #{random_mixup.3} parent=1 // pred_check
      _
    $region3: #{random_mixup.3} parent=1 // pred_check_branch
      %10 = sbr.rel (0) target = $region5
    $region4: #{random_mixup.3} parent=1 // pred_region
      _
    $region5: #{random_mixup.3} parent=1 // pred_fallthru
      _
    // Predicated region
    $region6: #{random_mixup.3} parent=1 // pred_check
      _
    $region7: #{random_mixup.3} parent=1 // pred_check_branch
      %12 = sbr.rel (0) target = $region9
    $region8: #{random_mixup.3} parent=1 // pred_region
      _
    $region9: #{random_mixup.3} parent=1 // pred_fallthru
      _
    %s13 = sld [smem:[#allocation2]]
    %v14 = vlaneseq
    %v15 = vand.u32 %v14, 127
    %v16 = vld [vmem:[%s1] sm:$0xff]
    %v17 = vld [vmem:[%s1 + $0x8] sm:$0xff]
    %18 = vset.pattern.permute.xlu0 0
    %19 = vperm.xlu0 %18, %v16
    %v20 = vpop.permute.xlu0 %19
    %21 = vset.pattern.permute.xlu0 0
    %22 = vperm.xlu0 %21, %v17
    %v23 = vpop.permute.xlu0 %22
    %vm24 = vcmp.eq.s32.totalorder %v20, %v15
    %vm25 = vcmp.eq.s32.totalorder %v23, %v15
    %v26 = vsel %vm24, 1, 0
    %v27 = vsel %vm25, 1, 0
    %v28 = vcvt.s32.f32 %v26
    %v29 = vcvt.s32.f32 %v27
    %v31 = vrot.slane %v29, 7
    %vm34 = vcmask 1040384
    %v35 = vrot.slane %v28, 7
    %v36 = vsel %vm34, %v35, %v31
    %v39 = vsel %vm34, %v31, %v35
    %v40 = vstv %s13
    %v41 = vmul.f32 %v40, %v28
    %v42 = vmul.f32 %v40, %v29
    %s43 = ssub.f32 1.0, %s13
    %v44 = vstv %s43
    %v45 = vmul.f32 %v44, %v39
    %v46 = vmul.f32 %v44, %v36
    %v47 = vadd.f32 %v41, %v45
    %v48 = vadd.f32 %v42, %v46
    %vm49 = vcmask 80896
    %50 = vst.msk [vmem:[#allocation3] sm:$0xff] %vm49, %v47
    %51 = vst.msk [vmem:[#allocation3 + $0x8] sm:$0xff] %vm49, %v48
    // Predicated region
    $region10: #{random_mixup.3} parent=1 // pred_check
      _
    $region11: #{random_mixup.3} parent=1 // pred_check_branch
      %53 = sbr.rel (0) target = $region13
    $region12: #{random_mixup.3} parent=1 // pred_region
      %s55 = ssub.s32 256, 256
      %56 = vsyncadd [#allocation4], %s55
      %s57 = sshll.u32 [#allocation3], 4
      %s58 = int_to_ptr.vmem [resolvable:$true] %s57
      %63 = dma.vmem_to_hbm [thread:$0]  %s58, 256, %s2, [#allocation4], 128, 128, 8
    $region13: #{random_mixup.3} parent=1 // pred_fallthru
      _
    // Predicated region
    $region14: #{random_mixup.3} parent=1 // pred_check
      _
    $region15: #{random_mixup.3} parent=1 // pred_check_branch
      %65 = sbr.rel (0) target = $region17
    $region16: #{random_mixup.3} parent=1 // pred_region
      %66 = dma.done [#allocation4], 256
    $region17: #{random_mixup.3} parent=1 // pred_fallthru
      _
    %67 = vsyncpa [#allocation4], 1

</llo_original>
